<compile_context>
chip_gen: v7x
topology: tpu7x:2x2x1
jax: 0.10.0
libtpu: 0.0.40
codegen_flags: <defaults>
</compile_context>

<pallas_src>
import functools

import jax
import jax.numpy as jnp
from jax.experimental import pallas as pl
from jax.experimental.pallas import tpu as pltpu

_LANES = 128
_EPS = 1e-10
# Per-input payload per grid step.  Big enough to amortize per-step grid
# overhead, small enough that 2 inputs x 2 pipeline buffers + accumulator stay
# well inside every chip's VMEM with the explicit limit below.
_BLOCK_BYTES = 3 * 1024 * 1024
_VMEM_LIMIT_BYTES = 32 * 1024 * 1024


def _lpips_kernel(total_rows, tile_rows, ragged,
                  x_ref, t_ref, o_ref, acc_ref):
    """One grid step: preprocess + normalize one (1, C, tile_rows, 128) tile,
    channel-sum the squared feature difference and accumulate it."""
    r = pl.program_id(1)

    @pl.when(r == 0)
    def _():
        acc_ref[...] = jnp.zeros_like(acc_ref)

    x = x_ref[0].astype(jnp.float32)        # (C, tile_rows, 128)
    t = t_ref[0].astype(jnp.float32)

    # Module preprocessing: clamp prediction to [0,1], map both to [-1, 1].
    x = jnp.clip(x, 0.0, 1.0) * 2.0 - 1.0
    t = t * 2.0 - 1.0

    # TODO(synk): VGG16 feature stack omitted (pretrained weights unavailable);
    # the preprocessed pixels act as the single feature layer.

    # LPIPS normalize_tensor: f / (||f||_channels + eps).  Channel axis is the
    # leading (non-vreg) axis -> full-vreg adds; sqrt + approx reciprocal run
    # on the EUP and the inverse is reused across channels.
    x_inv = pl.reciprocal(jnp.sqrt(jnp.sum(x * x, axis=0)) + _EPS, approx=True)
    t_inv = pl.reciprocal(jnp.sqrt(jnp.sum(t * t, axis=0)) + _EPS, approx=True)

    d = x * x_inv[None] - t * t_inv[None]
    # TODO(synk): learned per-channel 1x1 'lin' weights replaced by a uniform
    # channel sum.
    s = jnp.sum(d * d, axis=0)              # (tile_rows, 128)

    if ragged:
        # Partial last row tile: rows beyond the array hold garbage; zero them
        # before accumulating.
        rows_left = total_rows - r * tile_rows
        row_ids = jax.lax.broadcasted_iota(jnp.int32, s.shape, 0)
        s = jnp.where(row_ids < rows_left, s, 0.0)

    acc_ref[...] += s

    @pl.when(r == pl.num_programs(1) - 1)
    def _():
        # One cross-lane/sublane reduce per batch element.
        o_ref[...] = jnp.sum(acc_ref[...]).reshape(1, 1, 1)


def lpips_loss(x: jax.Array, t: jax.Array) -> jax.Array:
    """LPIPS-style perceptual distance (identity feature extractor) in Pallas."""
    assert x.shape == t.shape and x.ndim == 4, "expect matching NCHW tensors"
    n, c, h, w = x.shape
    p = h * w

    xr = x.reshape(n, c, p)                 # free (row-major contiguous)
    tr = t.reshape(n, c, p)

    # Lane-align the spatial axis.  For essentially all real image sizes
    # H*W % 128 == 0 and no copy is made.  Otherwise fall back to a zero pad,
    # which is exact: both tensors pad identically, so the padded positions'
    # normalized feature difference is exactly 0.
    p128 = pl.cdiv(p, _LANES) * _LANES
    if p128 != p:
        xr = jnp.pad(xr, ((0, 0), (0, 0), (0, p128 - p)))
        tr = jnp.pad(tr, ((0, 0), (0, 0), (0, p128 - p)))
    rows = p128 // _LANES
    xr = xr.reshape(n, c, rows, _LANES)     # free reshape
    tr = tr.reshape(n, c, rows, _LANES)

    # Row-tile size from a VMEM payload budget (native dtype streaming).
    itemsize = max(jnp.dtype(x.dtype).itemsize, jnp.dtype(t.dtype).itemsize)
    max_rows = max(8, (_BLOCK_BYTES // (c * _LANES * itemsize)) // 8 * 8)
    if rows <= max_rows:
        tile_rows = rows                    # single full-dim row tile
    else:
        tile_rows = max_rows                # multiple of 8
    nr = pl.cdiv(rows, tile_rows)
    ragged = (rows % tile_rows) != 0

    in_spec = pl.BlockSpec((1, c, tile_rows, _LANES), lambda b, r: (b, 0, r, 0))

    out = pl.pallas_call(
        functools.partial(_lpips_kernel, rows, tile_rows, ragged),
        out_shape=jax.ShapeDtypeStruct((n, 1, 1), jnp.float32),
        grid_spec=pltpu.PrefetchScalarGridSpec(
            num_scalar_prefetch=0,
            grid=(n, nr),
            in_specs=[in_spec, in_spec],
            # Same block index across the row (reduction) axis: per-batch
            # resident output, written once at the last row step.
            out_specs=pl.BlockSpec((1, 1, 1), lambda b, r: (b, 0, 0)),
            scratch_shapes=[pltpu.VMEM((tile_rows, _LANES), jnp.float32)],
        ),
        compiler_params=pltpu.CompilerParams(
            dimension_semantics=("parallel", "arbitrary"),
            vmem_limit_bytes=_VMEM_LIMIT_BYTES,
        ),
    )(xr, tr)

    # Spatial mean over the true H*W per sample, then batch mean.
    return jnp.sum(out) / jnp.float32(n * p)


def _reference(x: jax.Array, t: jax.Array) -> jax.Array:
    """Pure-JAX reference of the same (identity-feature) LPIPS pipeline."""
    xs = jnp.clip(x, 0.0, 1.0) * 2.0 - 1.0
    ts = t * 2.0 - 1.0

    def _norm(f):
        return f / (jnp.sqrt(jnp.sum(f * f, axis=1, keepdims=True)) + _EPS)

    d = (_norm(xs) - _norm(ts)) ** 2
    per_sample = jnp.sum(d, axis=1).mean(axis=(1, 2))  # lin-sum over C, spatial mean
    return jnp.mean(per_sample)                        # batch mean


if __name__ == "__main__":
    key = jax.random.PRNGKey(0)
    k_in, k_tgt = jax.random.split(key)

    # Small NCHW image pair in [0, 1], consistent with the module's contract.
    shape = (2, 3, 16, 16)
    x = jax.random.uniform(k_in, shape, dtype=jnp.float32)
    t = jax.random.uniform(k_tgt, shape, dtype=jnp.float32)

    loss = lpips_loss(x, t)
    jax.block_until_ready(loss)

    ref = _reference(x, t)
    # Tolerance loosened vs. the exact-divide reference because the kernel uses
    # the EUP approximate reciprocal for the channel-norm inverse.
    assert jnp.allclose(loss, ref, rtol=2e-2, atol=1e-4), (loss, ref)

    print("KERNEL_OK")
</pallas_src>

<mosaic_0001>
module attributes {stable_mosaic.version = 11 : i64} {
  func.func @_lpips_kernel(%arg0: i32, %arg1: i32, %arg2: memref<1x3x2x128xf32, #tpu.memory_space<vmem>>, %arg3: memref<1x3x2x128xf32, #tpu.memory_space<vmem>>, %arg4: memref<1x1x1xf32, #tpu.memory_space<vmem>>, %arg5: memref<2x128xf32, #tpu.memory_space<vmem>>) attributes {dimension_semantics = [#tpu.dimension_semantics<parallel>, #tpu.dimension_semantics<arbitrary>], iteration_bounds = array<i64: 2, 1>, scalar_prefetch = 0 : i64, scratch_operands = 1 : i64, tpu.core_type = #tpu.core_type<tc>, window_params = [{transform_indices = @transform_0, window_bounds = array<i64: 1, 3, 2, 128>}, {transform_indices = @transform_1, window_bounds = array<i64: 1, 3, 2, 128>}, {transform_indices = @transform_2, window_bounds = array<i64: 1, 1, 1>}]} {
    %c0_i32 = arith.constant 0 : i32
    %0 = arith.cmpi eq, %arg1, %c0_i32 : i32
    %1 = arith.extui %0 : i1 to i32
    %c0_i32_0 = arith.constant 0 : i32
    %2 = arith.cmpi ne, %1, %c0_i32_0 : i32
    scf.if %2 {
      %cst_24 = arith.constant 0.000000e+00 : f32
      %46 = vector.broadcast %cst_24 : f32 to vector<2x128xf32>
      %c0_25 = arith.constant 0 : index
      %c0_26 = arith.constant 0 : index
      %47 = vector.load %arg5[%c0_25, %c0_26] : memref<2x128xf32, #tpu.memory_space<vmem>>, vector<2x128xf32>
      tpu.vector_store %arg5[%c0_25, %c0_26], %46 {strides = array<i32>} : memref<2x128xf32, #tpu.memory_space<vmem>>, vector<2x128xf32>,
    } else {
    }
    %c0 = arith.constant 0 : index
    %c0_1 = arith.constant 0 : index
    %c0_2 = arith.constant 0 : index
    %c0_3 = arith.constant 0 : index
    %3 = vector.load %arg2[%c0, %c0_1, %c0_2, %c0_3] : memref<1x3x2x128xf32, #tpu.memory_space<vmem>>, vector<1x3x2x128xf32>
    %4 = vector.shape_cast %3 : vector<1x3x2x128xf32> to vector<3x2x128xf32>
    %c0_4 = arith.constant 0 : index
    %c0_5 = arith.constant 0 : index
    %c0_6 = arith.constant 0 : index
    %c0_7 = arith.constant 0 : index
    %5 = vector.load %arg3[%c0_4, %c0_5, %c0_6, %c0_7] : memref<1x3x2x128xf32, #tpu.memory_space<vmem>>, vector<1x3x2x128xf32>
    %6 = vector.shape_cast %5 : vector<1x3x2x128xf32> to vector<3x2x128xf32>
    %cst = arith.constant 0.000000e+00 : f32
    %cst_8 = arith.constant 1.000000e+00 : f32
    %7 = vector.broadcast %cst : f32 to vector<3x2x128xf32>
    %8 = arith.maximumf %7, %4 : vector<3x2x128xf32>
    %9 = vector.broadcast %cst_8 : f32 to vector<3x2x128xf32>
    %10 = arith.minimumf %9, %8 : vector<3x2x128xf32>
    %cst_9 = arith.constant 2.000000e+00 : f32
    %11 = vector.broadcast %cst_9 : f32 to vector<3x2x128xf32>
    %12 = arith.mulf %10, %11 : vector<3x2x128xf32>
    %cst_10 = arith.constant 1.000000e+00 : f32
    %13 = vector.broadcast %cst_10 : f32 to vector<3x2x128xf32>
    %14 = arith.subf %12, %13 : vector<3x2x128xf32>
    %cst_11 = arith.constant 2.000000e+00 : f32
    %15 = vector.broadcast %cst_11 : f32 to vector<3x2x128xf32>
    %16 = arith.mulf %6, %15 : vector<3x2x128xf32>
    %cst_12 = arith.constant 1.000000e+00 : f32
    %17 = vector.broadcast %cst_12 : f32 to vector<3x2x128xf32>
    %18 = arith.subf %16, %17 : vector<3x2x128xf32>
    %19 = arith.mulf %14, %14 : vector<3x2x128xf32>
    %cst_13 = arith.constant dense<0.000000e+00> : vector<2x128xf32>
    %20 = vector.multi_reduction <add>, %19, %cst_13 [0] : vector<3x2x128xf32> to vector<2x128xf32>
    %21 = math.sqrt %20 : vector<2x128xf32>
    %cst_14 = arith.constant 1.000000e-10 : f32
    %22 = vector.broadcast %cst_14 : f32 to vector<2x128xf32>
    %23 = arith.addf %21, %22 : vector<2x128xf32>
    %24 = tpu.reciprocal %23 {approx = true} : vector<2x128xf32> -> vector<2x128xf32>
    %25 = arith.mulf %18, %18 : vector<3x2x128xf32>
    %cst_15 = arith.constant dense<0.000000e+00> : vector<2x128xf32>
    %26 = vector.multi_reduction <add>, %25, %cst_15 [0] : vector<3x2x128xf32> to vector<2x128xf32>
    %27 = math.sqrt %26 : vector<2x128xf32>
    %cst_16 = arith.constant 1.000000e-10 : f32
    %28 = vector.broadcast %cst_16 : f32 to vector<2x128xf32>
    %29 = arith.addf %27, %28 : vector<2x128xf32>
    %30 = tpu.reciprocal %29 {approx = true} : vector<2x128xf32> -> vector<2x128xf32>
    %31 = vector.shape_cast %24 : vector<2x128xf32> to vector<1x2x128xf32>
    %32 = vector.broadcast %31 : vector<1x2x128xf32> to vector<3x2x128xf32>
    %33 = arith.mulf %14, %32 : vector<3x2x128xf32>
    %34 = vector.shape_cast %30 : vector<2x128xf32> to vector<1x2x128xf32>
    %35 = vector.broadcast %34 : vector<1x2x128xf32> to vector<3x2x128xf32>
    %36 = arith.mulf %18, %35 : vector<3x2x128xf32>
    %37 = arith.subf %33, %36 : vector<3x2x128xf32>
    %38 = arith.mulf %37, %37 : vector<3x2x128xf32>
    %cst_17 = arith.constant dense<0.000000e+00> : vector<2x128xf32>
    %39 = vector.multi_reduction <add>, %38, %cst_17 [0] : vector<3x2x128xf32> to vector<2x128xf32>
    %c0_18 = arith.constant 0 : index
    %c0_19 = arith.constant 0 : index
    %40 = vector.load %arg5[%c0_18, %c0_19] : memref<2x128xf32, #tpu.memory_space<vmem>>, vector<2x128xf32>
    %41 = arith.addf %40, %39 : vector<2x128xf32>
    %c0_20 = arith.constant 0 : index
    %c0_21 = arith.constant 0 : index
    %42 = vector.load %arg5[%c0_20, %c0_21] : memref<2x128xf32, #tpu.memory_space<vmem>>, vector<2x128xf32>
    tpu.vector_store %arg5[%c0_20, %c0_21], %41 {strides = array<i32>} : memref<2x128xf32, #tpu.memory_space<vmem>>, vector<2x128xf32>,
    %c0_i32_22 = arith.constant 0 : i32
    %43 = arith.cmpi eq, %arg1, %c0_i32_22 : i32
    %44 = arith.extui %43 : i1 to i32
    %c0_i32_23 = arith.constant 0 : i32
    %45 = arith.cmpi ne, %44, %c0_i32_23 : i32
    scf.if %45 {
      %c0_24 = arith.constant 0 : index
      %c0_25 = arith.constant 0 : index
      %46 = vector.load %arg5[%c0_24, %c0_25] : memref<2x128xf32, #tpu.memory_space<vmem>>, vector<2x128xf32>
      %47 = vector.shape_cast %46 : vector<2x128xf32> to vector<1x2x128xf32>
      %cst_26 = arith.constant dense<0.000000e+00> : vector<1xf32>
      %48 = vector.multi_reduction <add>, %47, %cst_26 [1, 2] : vector<1x2x128xf32> to vector<1xf32>
      %49 = vector.shape_cast %48 : vector<1xf32> to vector<1x1x1xf32>
      %50 = vector.extract %49[0, 0, 0] : f32 from vector<1x1x1xf32>
      %51 = vector.broadcast %50 : f32 to vector<1x1x1xf32>
      %c0_27 = arith.constant 0 : index
      %c0_28 = arith.constant 0 : index
      %c0_29 = arith.constant 0 : index
      %52 = vector.load %arg4[%c0_27, %c0_28, %c0_29] : memref<1x1x1xf32, #tpu.memory_space<vmem>>, vector<1x1x1xf32>
      tpu.vector_store %arg4[%c0_27, %c0_28, %c0_29], %51 {strides = array<i32>} : memref<1x1x1xf32, #tpu.memory_space<vmem>>, vector<1x1x1xf32>,
    } else {
    }
    return
  }
  func.func @transform_0(%arg0: i32, %arg1: i32) -> (i32, i32, i32, i32) {
    %c0_i32 = arith.constant 0 : i32
    %c0_i32_0 = arith.constant 0 : i32
    %c0_i32_1 = arith.constant 0 : i32
    return %arg0, %c0_i32, %arg1, %c0_i32_0 : i32, i32, i32, i32
  }
  func.func @transform_1(%arg0: i32, %arg1: i32) -> (i32, i32, i32, i32) {
    %c0_i32 = arith.constant 0 : i32
    %c0_i32_0 = arith.constant 0 : i32
    %c0_i32_1 = arith.constant 0 : i32
    return %arg0, %c0_i32, %arg1, %c0_i32_0 : i32, i32, i32, i32
  }
  func.func @transform_2(%arg0: i32, %arg1: i32) -> (i32, i32, i32) {
    %c0_i32 = arith.constant 0 : i32
    %c0_i32_0 = arith.constant 0 : i32
    %c0_i32_1 = arith.constant 0 : i32
    return %arg0, %c0_i32, %c0_i32_0 : i32, i32, i32
  }
}

</mosaic_0001>

<llo_original>
// kernel: tpu_custom_call.1
$region0: #{tpu_custom_call.1}
  #allocation0 [shape = 'u32[]', space=smem, size = 0x4, offset = 0x4, fixed_abs, tag = 'smem constant byte address 0x4 - core index']
  #allocation1 [shape = 'u32[144,128]{1,0:T(1,128)}', space=vmem, size = 0x12000, scoped, tag = 'internal scratch']
  #allocation2 [shape = 'f32[2,128]{1,0:T(2,128)}', space=vmem, size = 0x400, scoped, tag = 'scratch operand']
  %s0 = inlined_call_operand.hbm [shape: f32[2,3,2,128], index: 0, kind: input, shape index: {}]
  %s1 = inlined_call_operand.hbm [shape: f32[2,3,2,128], index: 1, kind: input, shape index: {}]
  %s2 = inlined_call_operand.vmem [shape: f32[2,1,1], index: 2, kind: output, shape index: {}]
  %s3 = sld [smem:[#allocation0]]
  $region57: #{tpu_custom_call.1} parent=0
    _
  %s5 = ssub.s32 1, %s3
  %s6 = scalar_select 0, %s5, %s3
  $region1: #{tpu_custom_call.1} parent=0
    #allocation3 [shape = 'u8[6144]{0}', space=vmem, size = 0x1800, scoped, tag = 'input window, operand 0']
    #allocation4 [shape = 's32[2]{0}', space=sflag, size = 0x8, scoped, tag = 'scoped memory for tpu_custom_call.1']
    #allocation5 [shape = 'u8[6144]{0}', space=vmem, size = 0x1800, scoped, tag = 'input window, operand 1']
    #allocation6 [shape = 's32[2]{0}', space=sflag, size = 0x8, scoped, tag = 'scoped memory for tpu_custom_call.1']
    %7 = vsyncpa [#allocation4], 0
    %s8 = scalar_lea.sflag [#allocation4], 1
    %9 = vsyncpa %s8, 0
    %10 = vsyncpa [#allocation6], 0
    %s11 = scalar_lea.sflag [#allocation6], 1
    %12 = vsyncpa %s11, 0
    loop: start=0, step=1, limit=4
    $region2: #{tpu_custom_call.1} parent=1 // loop_pre_header
      _
    $region3: #{tpu_custom_call.1} parent=1 // loop_header
      %s14 = sphi 0, %s18
      %p15 = scmp.ge.s32.totalorder %s14, 4
      %s21 = sphi 0, %s33
      %s22 = sphi 0, %s29
      %s23 = sphi 0, %s21
      %s24 = sphi 0, %s22
      %s25 = sphi 0, %s23
      %s26 = sphi 0, %s24
      %s38 = sphi 0, %s40
      %s41 = sphi 0, %s38
      %s42 = sphi 0, %s41
      %s58 = sphi 0, %s42
      %s66 = sphi 0, %s68
      %s69 = sphi 0, %s66
      %s70 = sphi 0, %s69
      %s86 = sphi 0, %s70
      %s92 = sphi 0, %s94
      %s95 = sphi 0, %s92
      %s96 = sphi 0, %s95
      %s112 = sphi 0, %s96
    $region4: #{tpu_custom_call.1} parent=1 // loop_header_branch
      %17 = sbr.rel (%p15) target = $region8
    $region5: #{tpu_custom_call.1} parent=1 // loop_body
      %s19 = ssub.s32 %s14, 1
      %s20 = ssub.s32 %s14, 2
      %s27 = sadd.s32 1, %s22
      %p28 = scmp.ge.s32.totalorder %s27, 1
      %s29 = scalar_select %p28, 0, %s27
      %s30 = sadd.s32 1, %s21
      %s31 = scalar_select %p28, %s30, %s21
      %p32 = scmp.ge.s32.totalorder %s31, 2
      %s33 = scalar_select %p32, 0, %s31
      %s34 = ssub.s32 %s21, %s33
      %s35 = ssub.s32 %s22, %s29
      %s36 = sor.u32 %s34, %s35
      %p37 = scmp.eq.s32.totalorder %s36, 0
      %s39 = sadd.s32 %s38, 1
      %s40 = scalar_select %p37, %s38, %s39
      %p43 = pneg %p37
      %p44 = scmp.eq.s32.totalorder %s14, 1
      %p45 = por %p43, %p44
      %p46 = scmp.ne.s32.totalorder %s38, %s41
      %p47 = scmp.eq.s32.totalorder %s14, 0
      %p48 = por %p46, %p47
      %p49 = scmp.ne.s32.totalorder %s38, %s41
      %p50 = scmp.eq.s32.totalorder %s19, 1
      %p51 = por %p49, %p50
      %p52 = scmp.ne.s32.totalorder %s41, %s42
      %p53 = scmp.eq.s32.totalorder %s19, 0
      %p54 = por %p52, %p53
      %p55 = scmp.ne.s32.totalorder %s41, %s42
      %p56 = scmp.eq.s32.totalorder %s20, 1
      %p57 = por %p55, %p56
      %p59 = scmp.ne.s32.totalorder %s42, %s58
      %p60 = scmp.eq.s32.totalorder %s20, 0
      %p61 = por %p59, %p60
      %s62 = ssub.s32 %s21, %s33
      %s63 = ssub.s32 %s22, %s29
      %s64 = sor.u32 %s62, %s63
      %p65 = scmp.eq.s32.totalorder %s64, 0
      %s67 = sadd.s32 %s66, 1
      %s68 = scalar_select %p65, %s66, %s67
      %p71 = pneg %p65
      %p72 = scmp.eq.s32.totalorder %s14, 1
      %p73 = por %p71, %p72
      %p74 = scmp.ne.s32.totalorder %s66, %s69
      %p75 = scmp.eq.s32.totalorder %s14, 0
      %p76 = por %p74, %p75
      %p77 = scmp.ne.s32.totalorder %s66, %s69
      %p78 = scmp.eq.s32.totalorder %s19, 1
      %p79 = por %p77, %p78
      %p80 = scmp.ne.s32.totalorder %s69, %s70
      %p81 = scmp.eq.s32.totalorder %s19, 0
      %p82 = por %p80, %p81
      %p83 = scmp.ne.s32.totalorder %s69, %s70
      %p84 = scmp.eq.s32.totalorder %s20, 1
      %p85 = por %p83, %p84
      %p87 = scmp.ne.s32.totalorder %s70, %s86
      %p88 = scmp.eq.s32.totalorder %s20, 0
      %p89 = por %p87, %p88
      %s90 = ssub.s32 %s21, %s33
      %p91 = scmp.eq.s32.totalorder %s90, 0
      %s93 = sadd.s32 %s92, 1
      %s94 = scalar_select %p91, %s92, %s93
      %p97 = pneg %p91
      %p98 = scmp.eq.s32.totalorder %s14, 1
      %p99 = por %p97, %p98
      %p100 = scmp.ne.s32.totalorder %s92, %s95
      %p101 = scmp.eq.s32.totalorder %s14, 0
      %p102 = por %p100, %p101
      %p103 = scmp.ne.s32.totalorder %s92, %s95
      %p104 = scmp.eq.s32.totalorder %s19, 1
      %p105 = por %p103, %p104
      %p106 = scmp.ne.s32.totalorder %s95, %s96
      %p107 = scmp.eq.s32.totalorder %s19, 0
      %p108 = por %p106, %p107
      %p109 = scmp.ne.s32.totalorder %s95, %s96
      %p110 = scmp.eq.s32.totalorder %s20, 1
      %p111 = por %p109, %p110
      %p113 = scmp.ne.s32.totalorder %s96, %s112
      %p114 = scmp.eq.s32.totalorder %s20, 0
      %p115 = por %p113, %p114
      %p116 = scmp.le.s32.totalorder 1, %s14
      %p117 = scmp.lt.s32.totalorder %s14, 3
      %p118 = pnand %p116, %p117
      %p119 = pneg %p118
      // Predicated region
      $region9: #{tpu_custom_call.1} parent=5 // pred_check
        _
      $region10: #{tpu_custom_call.1} parent=5 // pred_check_branch
        %121 = sbr.rel (%p118) target = $region12
      $region11: #{tpu_custom_call.1} parent=5 // pred_region
        %s122 = ssub.s32 %s14, 1
      $region12: #{tpu_custom_call.1} parent=5 // pred_fallthru
        _
      %p123 = scmp.lt.s32.totalorder %s14, 2
      // Predicated region
      $region13: #{tpu_custom_call.1} parent=5 // pred_check
        %p124 = pneg %p123
      $region14: #{tpu_custom_call.1} parent=5 // pred_check_branch
        %126 = sbr.rel (%p124) target = $region16
      $region15: #{tpu_custom_call.1} parent=5 // pred_region
        // Predicated region
        $region17: #{tpu_custom_call.1} parent=15 // pred_check
          %p127 = pneg %p48
        $region18: #{tpu_custom_call.1} parent=15 // pred_check_branch
          %129 = sbr.rel (%p127) target = $region20
        $region19: #{tpu_custom_call.1} parent=15 // pred_region
          %s130 = sand.u32 %s38, 1
          %s131 = scalar_lea.sflag [#allocation4], %s130
          %s132 = sand.u32 %s38, 1
          %s133 = smul.addr %s132, 6
          %s134 = scalar_lea.vmem [#allocation3], %s133
          %s136 = ssub.s32 96, 96
          %137 = vsyncadd %s131, %s136
          %s138 = smul.addr %s21, 3
          %s139 = sadd.s32 %s22, %s138
          %s140 = smul.addr %s139, 32
          %s141 = scalar_lea.hbm %s0, %s140
          %s142 = sshll.u32 %s134, 4
          %s143 = int_to_ptr.vmem [resolvable:$true] %s142
          %148 = dma.hbm_to_vmem [thread:$0]  %s141, 96, %s143, %s131, 32, 32, 2
        $region20: #{tpu_custom_call.1} parent=15 // pred_fallthru
          _
        // Predicated region
        $region21: #{tpu_custom_call.1} parent=15 // pred_check
          %p149 = pneg %p76
        $region22: #{tpu_custom_call.1} parent=15 // pred_check_branch
          %151 = sbr.rel (%p149) target = $region24
        $region23: #{tpu_custom_call.1} parent=15 // pred_region
          %s152 = sand.u32 %s66, 1
          %s153 = scalar_lea.sflag [#allocation6], %s152
          %s154 = sand.u32 %s66, 1
          %s155 = smul.addr %s154, 6
          %s156 = scalar_lea.vmem [#allocation5], %s155
          %s158 = ssub.s32 96, 96
          %159 = vsyncadd %s153, %s158
          %s160 = smul.addr %s21, 3
          %s161 = sadd.s32 %s22, %s160
          %s162 = smul.addr %s161, 32
          %s163 = scalar_lea.hbm %s1, %s162
          %s164 = sshll.u32 %s156, 4
          %s165 = int_to_ptr.vmem [resolvable:$true] %s164
          %170 = dma.hbm_to_vmem [thread:$0]  %s163, 96, %s165, %s153, 32, 32, 2
        $region24: #{tpu_custom_call.1} parent=15 // pred_fallthru
          _
      $region16: #{tpu_custom_call.1} parent=5 // pred_fallthru
        _
      %p171 = scmp.le.s32.totalorder 1, %s14
      %p172 = scmp.lt.s32.totalorder %s14, 3
      %p173 = pnand %p171, %p172
      %p174 = pneg %p173
      // Predicated region
      $region25: #{tpu_custom_call.1} parent=5 // pred_check
        _
      $region26: #{tpu_custom_call.1} parent=5 // pred_check_branch
        %176 = sbr.rel (%p173) target = $region28
      $region27: #{tpu_custom_call.1} parent=5 // pred_region
        %s177 = ssub.s32 %s14, 1
        %s178 = sand.u32 %s41, 1
        %s179 = scalar_lea.sflag [#allocation4], %s178
        %s180 = sand.u32 %s41, 1
        %s181 = smul.addr %s180, 6
        %s182 = scalar_lea.vmem [#allocation3], %s181
        // Predicated region
        $region29: #{tpu_custom_call.1} parent=27 // pred_check
          %p183 = pneg %p54
        $region30: #{tpu_custom_call.1} parent=27 // pred_check_branch
          %185 = sbr.rel (%p183) target = $region32
        $region31: #{tpu_custom_call.1} parent=27 // pred_region
          %186 = dma.done %s179, 96
        $region32: #{tpu_custom_call.1} parent=27 // pred_fallthru
          _
        %s187 = sand.u32 %s69, 1
        %s188 = scalar_lea.sflag [#allocation6], %s187
        %s189 = sand.u32 %s69, 1
        %s190 = smul.addr %s189, 6
        %s191 = scalar_lea.vmem [#allocation5], %s190
        // Predicated region
        $region33: #{tpu_custom_call.1} parent=27 // pred_check
          %p192 = pneg %p82
        $region34: #{tpu_custom_call.1} parent=27 // pred_check_branch
          %194 = sbr.rel (%p192) target = $region36
        $region35: #{tpu_custom_call.1} parent=27 // pred_region
          %195 = dma.done %s188, 96
        $region36: #{tpu_custom_call.1} parent=27 // pred_fallthru
          _
        %s196 = sand.u32 %s41, 1
        %s197 = scalar_lea.sflag [#allocation4], %s196
        %s198 = sand.u32 %s41, 1
        %s199 = smul.addr %s198, 6
        %s200 = scalar_lea.vmem [#allocation3], %s199
        %p201 = pneg %p54
        %p202 = pneg %p51
        %s203 = sand.u32 %s69, 1
        %s204 = scalar_lea.sflag [#allocation6], %s203
        %s205 = sand.u32 %s69, 1
        %s206 = smul.addr %s205, 6
        %s207 = scalar_lea.vmem [#allocation5], %s206
        %p208 = pneg %p82
        %p209 = pneg %p79
        %p210 = pneg %p108
        %p211 = pneg %p105
        %p212 = scmp.lt.s32.totalorder %s23, 1
        %s213 = scalar_select %p212, %s23, 1
        %s214 = scalar_lea.vmem %s2, %s213
        %p215 = scmp.lt.s32.totalorder %s23, 1
        %s216 = scalar_select %p215, %s23, 1
        %s217 = scalar_lea.vmem %s2, %s216
        %p218 = scmp.eq.s32.totalorder %s24, 0
        // Predicated region
        $region37: #{tpu_custom_call.1} parent=27 // pred_check
          %p219 = pneg %p218
        $region38: #{tpu_custom_call.1} parent=27 // pred_check_branch
          %221 = sbr.rel (%p219) target = $region40
        $region39: #{tpu_custom_call.1} parent=27 // pred_region
          %222 = vst [vmem:[#allocation2] sm:$0x3] 0.0
        $region40: #{tpu_custom_call.1} parent=27 // pred_fallthru
          _
        %v223 = vld [vmem:[%s182] sm:$0x3]
        %v224 = vld [vmem:[%s182 + $0x2] sm:$0x3]
        %v225 = vld [vmem:[%s182 + $0x4] sm:$0x3]
        %v226 = vld [vmem:[%s191] sm:$0x3]
        %v227 = vld [vmem:[%s191 + $0x2] sm:$0x3]
        %v228 = vld [vmem:[%s191 + $0x4] sm:$0x3]
        %v229 = vmax.f32 %v223, 0.0
        %v230 = vmax.f32 %v224, 0.0
        %v231 = vmax.f32 %v225, 0.0
        %v232 = vmin.f32 %v229, 1.0
        %v233 = vmin.f32 %v230, 1.0
        %v234 = vmin.f32 %v231, 1.0
        %v235 = vmul.f32 %v232, 2.0
        %v236 = vmul.f32 %v233, 2.0
        %v237 = vmul.f32 %v234, 2.0
        %v238 = vsub.f32 %v235, 1.0
        %v239 = vsub.f32 %v236, 1.0
        %v240 = vsub.f32 %v237, 1.0
        %v241 = vmul.f32 %v226, 2.0
        %v242 = vmul.f32 %v227, 2.0
        %v243 = vmul.f32 %v228, 2.0
        %v244 = vsub.f32 %v241, 1.0
        %v245 = vsub.f32 %v242, 1.0
        %v246 = vsub.f32 %v243, 1.0
        %v247 = vmul.f32 %v238, %v238
        %v248 = vmul.f32 %v239, %v239
        %v249 = vmul.f32 %v240, %v240
        %vm250 = vcmask 1041408
        %v251 = vsel %vm250, %v247, 0.0
        %v252 = vsel %vm250, %v248, 0.0
        %v253 = vadd.f32 %v251, %v252
        %v254 = vsel %vm250, %v249, 0.0
        %v255 = vadd.f32 %v253, %v254
        %v256 = vrsqrt.pop %v255
        %v257 = vmul.f32 %v255, %v256
        %vm258 = vcmp.eq.f32.partialorder %v255, inf
        %v259 = vsel %vm258, %v255, %v257
        %vm260 = vcmp.eq.f32.partialorder %v255, 0.0
        %v261 = vand.u32 %v255, 2147483648
        %v262 = vsel %vm260, %v261, %v259
        %v263 = vadd.f32 %v262, 1e-10
        %v264 = vrcp.pop %v263
        %v265 = vmul.f32 %v244, %v244
        %v266 = vmul.f32 %v245, %v245
        %v267 = vmul.f32 %v246, %v246
        %v268 = vsel %vm250, %v265, 0.0
        %v269 = vsel %vm250, %v266, 0.0
        %v270 = vadd.f32 %v268, %v269
        %v271 = vsel %vm250, %v267, 0.0
        %v272 = vadd.f32 %v270, %v271
        %v273 = vrsqrt.pop %v272
        %v274 = vmul.f32 %v272, %v273
        %vm275 = vcmp.eq.f32.partialorder %v272, inf
        %v276 = vsel %vm275, %v272, %v274
        %vm277 = vcmp.eq.f32.partialorder %v272, 0.0
        %v278 = vand.u32 %v272, 2147483648
        %v279 = vsel %vm277, %v278, %v276
        %v280 = vadd.f32 %v279, 1e-10
        %v281 = vrcp.pop %v280
        %v282 = vmul.f32 %v238, %v264
        %v283 = vmul.f32 %v239, %v264
        %v284 = vmul.f32 %v240, %v264
        %v285 = vmul.f32 %v244, %v281
        %v286 = vmul.f32 %v245, %v281
        %v287 = vmul.f32 %v246, %v281
        %v288 = vsub.f32 %v282, %v285
        %v289 = vsub.f32 %v283, %v286
        %v290 = vsub.f32 %v284, %v287
        %v291 = vmul.f32 %v288, %v288
        %v292 = vmul.f32 %v289, %v289
        %v293 = vmul.f32 %v290, %v290
        %v294 = vsel %vm250, %v291, 0.0
        %v295 = vsel %vm250, %v292, 0.0
        %v296 = vadd.f32 %v294, %v295
        %v297 = vsel %vm250, %v293, 0.0
        %v298 = vadd.f32 %v296, %v297
        %v299 = vld [vmem:[#allocation2] sm:$0x3]
        %v300 = vadd.f32 %v299, %v298
        %301 = vst [vmem:[#allocation2] sm:$0x3] %v300
        // Predicated region
        $region41: #{tpu_custom_call.1} parent=27 // pred_check
          %p302 = pneg %p218
        $region42: #{tpu_custom_call.1} parent=27 // pred_check_branch
          %304 = sbr.rel (%p302) target = $region44
        $region43: #{tpu_custom_call.1} parent=27 // pred_region
          %v305 = vld [vmem:[#allocation2] sm:$0x3]
          %v306 = vsel %vm250, %v305, 0.0
          %307 = vadd.xlane.f32.xlu0 %v306
          %v308 = vpop.xlane.xlu0 %307
          %v309 = vrot.slane %v308, 4
          %v310 = vadd.f32 %v308, %v309
          %v311 = vrot.slane %v310, 2
          %v312 = vadd.f32 %v310, %v311
          %v313 = vrot.slane %v312, 1
          %v314 = vadd.f32 %v312, %v313
          %s315 = vtos %v314
          %v316 = vstv %s315
          %vm317 = vcmask 0
          %318 = vst.msk [vmem:[%s217] sm:$0x1] %vm317, %v316
        $region44: #{tpu_custom_call.1} parent=27 // pred_fallthru
          _
        %p319 = scmp.lt.s32.totalorder %s23, 1
        %s320 = scalar_select %p319, %s23, 1
        %s321 = scalar_lea.vmem %s2, %s320
        // Predicated region
        $region45: #{tpu_custom_call.1} parent=27 // pred_check
          %p322 = pneg %p105
        $region46: #{tpu_custom_call.1} parent=27 // pred_check_branch
          %324 = sbr.rel (%p322) target = $region48
        $region47: #{tpu_custom_call.1} parent=27 // pred_region
          _
        $region48: #{tpu_custom_call.1} parent=27 // pred_fallthru
          _
      $region28: #{tpu_custom_call.1} parent=5 // pred_fallthru
        _
      %p325 = scmp.le.s32.totalorder 2, %s14
      // Predicated region
      $region49: #{tpu_custom_call.1} parent=5 // pred_check
        %p326 = pneg %p325
      $region50: #{tpu_custom_call.1} parent=5 // pred_check_branch
        %328 = sbr.rel (%p326) target = $region52
      $region51: #{tpu_custom_call.1} parent=5 // pred_region
        %s329 = ssub.s32 %s14, 2
        // Predicated region
        $region53: #{tpu_custom_call.1} parent=51 // pred_check
          %p330 = pneg %p111
        $region54: #{tpu_custom_call.1} parent=51 // pred_check_branch
          %332 = sbr.rel (%p330) target = $region56
        $region55: #{tpu_custom_call.1} parent=51 // pred_region
          %p333 = scmp.lt.s32.totalorder %s25, 1
          %s334 = scalar_select %p333, %s25, 1
          %s335 = scalar_lea.vmem %s2, %s334
        $region56: #{tpu_custom_call.1} parent=51 // pred_fallthru
          _
      $region52: #{tpu_custom_call.1} parent=5 // pred_fallthru
        _
    $region6: #{tpu_custom_call.1} parent=1 // loop_footer
      %s18 = sadd.s32 1, %s14
    $region7: #{tpu_custom_call.1} parent=1 // loop_footer_branch
      %13 = sbr.rel target = $region3
    $region8: #{tpu_custom_call.1} parent=1 // loop_exit
      _
    %336 = vsyncpa [#allocation4], 1
    %s337 = scalar_lea.sflag [#allocation4], 1
    %338 = vsyncpa %s337, 1
    %339 = vsyncpa [#allocation6], 1
    %s340 = scalar_lea.sflag [#allocation6], 1
    %341 = vsyncpa %s340, 1

</llo_original>
